<compile_context>
chip_gen: v7x
topology: tpu7x:2x2x1
jax: 0.10.0
libtpu: 0.0.40
codegen_flags: <defaults>
</compile_context>

<pallas_src>
import math

import jax
import jax.numpy as jnp
import numpy as np
from jax.experimental import pallas as pl
from jax.experimental.pallas import tpu as pltpu


_LANES = 512                  # lane width of the dense layout (multiple of 128)
_PALLAS_MIN_ELEMS = 1 << 20   # below this, XLA's fused x*w+b is already optimal


# ---------------------------------------------------------------------------
# Pallas kernel: the affine hot path  y = x * w + b  on a lane-dense tile
# ---------------------------------------------------------------------------
def _affine_kernel(wb_ref, x_ref, o_ref):
    # wb_ref: SMEM (2,) float32 = [w, b]; x_ref/o_ref: VMEM (tile_rows, _LANES)
    x = x_ref[...].astype(jnp.float32)
    o_ref[...] = (x * wb_ref[0] + wb_ref[1]).astype(o_ref.dtype)


def _round_up(a, m):
    return ((a + m - 1) // m) * m


def _tile_rows_cap():
    """Per-generation row-tile cap (tile bytes = cap * _LANES * 4)."""
    try:
        kind = jax.devices()[0].device_kind.lower()
    except Exception:  # pragma: no cover - defensive
        kind = ""
    # v5e: 16 MiB scoped-VMEM default -> 2 MiB tiles (in+out double-buffered = 8 MiB).
    if "v5" in kind:
        return 1024
    # v6e / v7x: 32 MiB scoped-VMEM default -> 4 MiB tiles (footprint 16 MiB).
    return 2048


def percentile_linear(x, weight, bias, *, force_pallas=False):
    """Applies y = x @ weight.T + bias with weight (1,1), bias (1,), x (N,1)."""
    assert x.ndim == 2 and x.shape[-1] == 1
    N = x.shape[0]
    w = weight[0, 0].astype(jnp.float32)
    b = bias[0].astype(jnp.float32)

    # The Pallas path only wins when the lane-dense relayout is copy-free
    # (N a multiple of 512) and the array is large enough to amortize launch
    # overhead.  Otherwise XLA's fused multiply-add is already at HBM roofline.
    use_pallas = force_pallas or (N >= _PALLAS_MIN_ELEMS and N % _LANES == 0)
    if not use_pallas:
        return (x.astype(jnp.float32) * w + b).astype(x.dtype)

    wb = jnp.stack([w, b])  # (2,) float32 -> SMEM

    if N % _LANES == 0:
        # Copy-free: contiguous (N,1) -> (rows, 512) is a pure bitcast reshape.
        rows = N // _LANES
        x2d = x.reshape(rows, _LANES)
        pad = 0
    else:
        # Ragged N (reached only under force_pallas): minimal pad to a whole
        # number of 512-lane rows (<= 511 extra elements), sliced off at the end.
        rows = pl.cdiv(N, _LANES)
        pad = rows * _LANES - N
        x2d = jnp.pad(x.reshape(N), (0, pad)).reshape(rows, _LANES)

    # Row tile: as large as the per-generation cap allows, but small enough
    # that the grid has >= 2 steps when possible (keeps both TCs busy on v7x).
    tile_rows = max(8, min(_tile_rows_cap(), _round_up(pl.cdiv(rows, 2), 8)))
    grid = (pl.cdiv(rows, tile_rows),)   # partial boundary block handled by Pallas

    out2d = pl.pallas_call(
        _affine_kernel,
        out_shape=jax.ShapeDtypeStruct((rows, _LANES), x.dtype),
        grid=grid,
        in_specs=[
            pl.BlockSpec(memory_space=pltpu.MemorySpace.SMEM),     # wb (2,) f32
            pl.BlockSpec((tile_rows, _LANES), lambda i: (i, 0)),   # x tile
        ],
        out_specs=pl.BlockSpec((tile_rows, _LANES), lambda i: (i, 0)),
        compiler_params=pltpu.CompilerParams(
            # Row tiles are independent: shard across the 2 TCs on v7x.
            dimension_semantics=("parallel",),
        ),
    )(wb, x2d)

    if pad == 0:
        return out2d.reshape(N, 1)                       # free reshape back
    return out2d.reshape(rows * _LANES)[:N].reshape(N, 1)


# ---------------------------------------------------------------------------
# Deterministic parameter construction (mirrors the module's __init__ logic)
# ---------------------------------------------------------------------------
def init_percentile_params(X_train, y_train, num):
    """Reproduce __init__: percentile-based affine params for column `num`."""
    # TODO(synk): the pandas/percentile statistics are host-side __init__ work,
    # not part of the forward pass, so they stay in NumPy (no Pallas kernel).
    X_train = np.asarray(X_train, dtype=np.float64)
    y_train = np.asarray(y_train, dtype=np.float64).reshape(-1)
    n = X_train.shape[0]
    col = X_train[:, num]

    # pandas df.corr() is Pearson correlation
    corr = np.corrcoef(col, y_train)[0, 1]

    col_sorted = np.sort(col)
    alpha = col_sorted[math.floor(n * 0.05)]
    beta = col_sorted[math.floor(n * 0.95)]

    if corr >= 0:
        w = 2.0 * 1.1 / (beta - alpha)
        b = -1.1 * (beta + alpha) / (beta - alpha)
    else:
        w = -2.0 * 1.1 / (beta - alpha)
        b = 1.1 * (beta + alpha) / (beta - alpha)

    weight = jnp.asarray([[w]], dtype=jnp.float32)   # shape (1, 1), like nn.Parameter
    bias = jnp.asarray([b], dtype=jnp.float32)       # shape (1,)
    return weight, bias


# ---------------------------------------------------------------------------
# Demo / self-test
# ---------------------------------------------------------------------------
if __name__ == "__main__":
    key = jax.random.PRNGKey(0)
    k_x, k_y, k_in, k_in2, k_in3 = jax.random.split(key, 5)

    # Synthetic "training data" used only to derive the affine parameters.
    n_train, n_feat, num = 200, 4, 2
    X_train = jax.random.normal(k_x, (n_train, n_feat), dtype=jnp.float32)
    # target positively correlated with column `num` plus noise
    y_train = (X_train[:, num] * 0.7
               + 0.3 * jax.random.normal(k_y, (n_train,), dtype=jnp.float32))

    weight, bias = init_percentile_params(
        np.asarray(X_train), np.asarray(y_train), num)

    # --- copy-free Pallas path: N divisible by 512, multi-step grid ---------
    x_a = jax.random.normal(k_in, (8192, 1), dtype=jnp.float32)
    y_a = jax.block_until_ready(
        percentile_linear(x_a, weight, bias, force_pallas=True))
    ref_a = x_a @ weight.T + bias
    np.testing.assert_allclose(np.asarray(y_a), np.asarray(ref_a),
                               rtol=1e-6, atol=1e-6)

    # --- ragged N: minimal-pad Pallas path (forced) --------------------------
    x_b = jax.random.normal(k_in2, (2085, 1), dtype=jnp.float32)
    y_b = jax.block_until_ready(
        percentile_linear(x_b, weight, bias, force_pallas=True))
    ref_b = x_b @ weight.T + bias
    np.testing.assert_allclose(np.asarray(y_b), np.asarray(ref_b),
                               rtol=1e-6, atol=1e-6)

    # --- small input: fused-XLA fallback path --------------------------------
    x_c = jax.random.normal(k_in3, (8, 1), dtype=jnp.float32)
    y_c = jax.block_until_ready(percentile_linear(x_c, weight, bias))
    ref_c = x_c @ weight.T + bias
    np.testing.assert_allclose(np.asarray(y_c), np.asarray(ref_c),
                               rtol=1e-6, atol=1e-6)

    print("KERNEL_OK")
</pallas_src>

<mosaic_0001>
module attributes {stable_mosaic.version = 11 : i64} {
  func.func @_affine_kernel(%arg0: i32, %arg1: memref<2xf32, #tpu.memory_space<smem>>, %arg2: memref<8x512xf32, #tpu.memory_space<vmem>>, %arg3: memref<8x512xf32, #tpu.memory_space<vmem>>) attributes {dimension_semantics = [#tpu.dimension_semantics<parallel>], iteration_bounds = array<i64: 2>, scalar_prefetch = 0 : i64, scratch_operands = 0 : i64, tpu.core_type = #tpu.core_type<tc>, window_params = [{transform_indices = @transform_0, window_bounds = array<i64: 2>}, {transform_indices = @transform_1, window_bounds = array<i64: 8, 512>}, {transform_indices = @transform_2, window_bounds = array<i64: 8, 512>}]} {
    %c0 = arith.constant 0 : index
    %c0_0 = arith.constant 0 : index
    %0 = vector.load %arg2[%c0, %c0_0] : memref<8x512xf32, #tpu.memory_space<vmem>>, vector<8x512xf32>
    %c0_1 = arith.constant 0 : index
    %1 = memref.load %arg1[%c0_1] : memref<2xf32, #tpu.memory_space<smem>>
    %2 = vector.broadcast %1 : f32 to vector<8x512xf32>
    %3 = arith.mulf %0, %2 : vector<8x512xf32>
    %c1 = arith.constant 1 : index
    %4 = memref.load %arg1[%c1] : memref<2xf32, #tpu.memory_space<smem>>
    %5 = vector.broadcast %4 : f32 to vector<8x512xf32>
    %6 = arith.addf %3, %5 : vector<8x512xf32>
    %c0_2 = arith.constant 0 : index
    %c0_3 = arith.constant 0 : index
    %7 = vector.load %arg3[%c0_2, %c0_3] : memref<8x512xf32, #tpu.memory_space<vmem>>, vector<8x512xf32>
    tpu.vector_store %arg3[%c0_2, %c0_3], %6 {strides = array<i32>} : memref<8x512xf32, #tpu.memory_space<vmem>>, vector<8x512xf32>,
    return
  }
  func.func @transform_0(%arg0: i32) -> i32 {
    %c0_i32 = arith.constant 0 : i32
    %c0_i32_0 = arith.constant 0 : i32
    return %c0_i32 : i32
  }
  func.func @transform_1(%arg0: i32) -> (i32, i32) {
    %c0_i32 = arith.constant 0 : i32
    %c0_i32_0 = arith.constant 0 : i32
    return %arg0, %c0_i32 : i32, i32
  }
  func.func @transform_2(%arg0: i32) -> (i32, i32) {
    %c0_i32 = arith.constant 0 : i32
    %c0_i32_0 = arith.constant 0 : i32
    return %arg0, %c0_i32 : i32, i32
  }
}

</mosaic_0001>

<llo_original>
// kernel: tpu_custom_call.1
$region0: #{tpu_custom_call.1}
  #allocation0 [shape = 'u32[]', space=smem, size = 0x4, offset = 0x4, fixed_abs, tag = 'smem constant byte address 0x4 - core index']
  #allocation1 [shape = 'u32[144,128]{1,0:T(1,128)}', space=vmem, size = 0x12000, scoped, tag = 'internal scratch']
  %s0 = inlined_call_operand.hbm [shape: f32[2], index: 0, kind: input, shape index: {}]
  %s1 = inlined_call_operand.hbm [shape: f32[16,512], index: 1, kind: input, shape index: {}]
  %s2 = inlined_call_operand.hbm [shape: f32[16,512], index: 2, kind: output, shape index: {}]
  %s3 = sld [smem:[#allocation0]]
  $region49: #{tpu_custom_call.1} parent=0
    _
  %s5 = ssub.s32 1, %s3
  %s6 = scalar_select 0, %s5, %s3
  $region1: #{tpu_custom_call.1} parent=0
    #allocation2 [shape = 'u8[512]{0}', space=smem, size = 0x200, scoped, tag = 'input window, operand 0, single buffered']
    #allocation3 [shape = 's32[2]{0}', space=sflag, size = 0x8, scoped, tag = 'scoped memory for tpu_custom_call.1']
    #allocation4 [shape = 's32[2]{0}', space=sflag, size = 0x8, scoped, tag = 'scoped memory for tpu_custom_call.1']
    #allocation5 [shape = 's32[2]{0}', space=sflag, size = 0x8, scoped, tag = 'scoped memory for tpu_custom_call.1']
    #allocation6 [shape = 'u8[32768]{0}', space=vmem, size = 0x8000, scoped, tag = 'input window, operand 1']
    #allocation7 [shape = 'u8[32768]{0}', space=vmem, size = 0x8000, scoped, tag = 'output window, operand 0']
    %7 = vsyncpa [#allocation5], 0
    %8 = vsyncpa [#allocation3], 0
    %s9 = scalar_lea.sflag [#allocation3], 1
    %10 = vsyncpa %s9, 0
    %11 = vsyncpa [#allocation4], 0
    %s12 = scalar_lea.sflag [#allocation4], 1
    %13 = vsyncpa %s12, 0
    loop: start=0, step=1, limit=4
    $region2: #{tpu_custom_call.1} parent=1 // loop_pre_header
      _
    $region3: #{tpu_custom_call.1} parent=1 // loop_header
      %s15 = sphi 0, %s19
      %p16 = scmp.ge.s32.totalorder %s15, 4
      %s23 = sphi 0, %s23
      %s25 = sphi 0, %s23
      %s26 = sphi 0, %s25
      %s40 = sphi 0, %s26
      %s46 = sphi 0, %s48
      %s49 = sphi 0, %s46
      %s50 = sphi 0, %s49
      %s66 = sphi 0, %s50
      %s72 = sphi 0, %s74
      %s75 = sphi 0, %s72
      %s76 = sphi 0, %s75
      %s92 = sphi 0, %s76
    $region4: #{tpu_custom_call.1} parent=1 // loop_header_branch
      %18 = sbr.rel (%p16) target = $region8
    $region5: #{tpu_custom_call.1} parent=1 // loop_body
      %s20 = ssub.s32 %s15, 1
      %s21 = ssub.s32 %s15, 2
      %s22 = sadd.s32 %s15, 1
      %s24 = sadd.s32 %s23, 1
      %p27 = scmp.eq.s32.totalorder %s15, 1
      %p28 = scmp.ne.s32.totalorder %s23, %s25
      %p29 = scmp.eq.s32.totalorder %s15, 0
      %p30 = por %p28, %p29
      %p31 = scmp.ne.s32.totalorder %s23, %s25
      %p32 = scmp.eq.s32.totalorder %s20, 1
      %p33 = por %p31, %p32
      %p34 = scmp.ne.s32.totalorder %s25, %s26
      %p35 = scmp.eq.s32.totalorder %s20, 0
      %p36 = por %p34, %p35
      %p37 = scmp.ne.s32.totalorder %s25, %s26
      %p38 = scmp.eq.s32.totalorder %s21, 1
      %p39 = por %p37, %p38
      %p41 = scmp.ne.s32.totalorder %s26, %s40
      %p42 = scmp.eq.s32.totalorder %s21, 0
      %p43 = por %p41, %p42
      %s44 = ssub.s32 %s15, %s22
      %p45 = scmp.eq.s32.totalorder %s44, 0
      %s47 = sadd.s32 %s46, 1
      %s48 = scalar_select %p45, %s46, %s47
      %p51 = pneg %p45
      %p52 = scmp.eq.s32.totalorder %s15, 1
      %p53 = por %p51, %p52
      %p54 = scmp.ne.s32.totalorder %s46, %s49
      %p55 = scmp.eq.s32.totalorder %s15, 0
      %p56 = por %p54, %p55
      %p57 = scmp.ne.s32.totalorder %s46, %s49
      %p58 = scmp.eq.s32.totalorder %s20, 1
      %p59 = por %p57, %p58
      %p60 = scmp.ne.s32.totalorder %s49, %s50
      %p61 = scmp.eq.s32.totalorder %s20, 0
      %p62 = por %p60, %p61
      %p63 = scmp.ne.s32.totalorder %s49, %s50
      %p64 = scmp.eq.s32.totalorder %s21, 1
      %p65 = por %p63, %p64
      %p67 = scmp.ne.s32.totalorder %s50, %s66
      %p68 = scmp.eq.s32.totalorder %s21, 0
      %p69 = por %p67, %p68
      %s70 = ssub.s32 %s15, %s22
      %p71 = scmp.eq.s32.totalorder %s70, 0
      %s73 = sadd.s32 %s72, 1
      %s74 = scalar_select %p71, %s72, %s73
      %p77 = pneg %p71
      %p78 = scmp.eq.s32.totalorder %s15, 1
      %p79 = por %p77, %p78
      %p80 = scmp.ne.s32.totalorder %s72, %s75
      %p81 = scmp.eq.s32.totalorder %s15, 0
      %p82 = por %p80, %p81
      %p83 = scmp.ne.s32.totalorder %s72, %s75
      %p84 = scmp.eq.s32.totalorder %s20, 1
      %p85 = por %p83, %p84
      %p86 = scmp.ne.s32.totalorder %s75, %s76
      %p87 = scmp.eq.s32.totalorder %s20, 0
      %p88 = por %p86, %p87
      %p89 = scmp.ne.s32.totalorder %s75, %s76
      %p90 = scmp.eq.s32.totalorder %s21, 1
      %p91 = por %p89, %p90
      %p93 = scmp.ne.s32.totalorder %s76, %s92
      %p94 = scmp.eq.s32.totalorder %s21, 0
      %p95 = por %p93, %p94
      %p96 = scmp.le.s32.totalorder 1, %s15
      %p97 = scmp.lt.s32.totalorder %s15, 3
      %p98 = pnand %p96, %p97
      %p99 = pneg %p98
      // Predicated region
      $region9: #{tpu_custom_call.1} parent=5 // pred_check
        _
      $region10: #{tpu_custom_call.1} parent=5 // pred_check_branch
        %101 = sbr.rel (%p98) target = $region12
      $region11: #{tpu_custom_call.1} parent=5 // pred_region
        %s102 = ssub.s32 %s15, 1
        // Predicated region
        $region13: #{tpu_custom_call.1} parent=11 // pred_check
          %p103 = pneg %p36
        $region14: #{tpu_custom_call.1} parent=11 // pred_check_branch
          %105 = sbr.rel (%p103) target = $region16
        $region15: #{tpu_custom_call.1} parent=11 // pred_region
          %s107 = ssub.s32 16, 16
          %108 = vsyncadd [#allocation5], %s107
          %111 = dma.hbm_to_smem %s0, 16, [#allocation2], [#allocation5]
        $region16: #{tpu_custom_call.1} parent=11 // pred_fallthru
          _
      $region12: #{tpu_custom_call.1} parent=5 // pred_fallthru
        _
      %p112 = scmp.lt.s32.totalorder %s15, 2
      // Predicated region
      $region17: #{tpu_custom_call.1} parent=5 // pred_check
        %p113 = pneg %p112
      $region18: #{tpu_custom_call.1} parent=5 // pred_check_branch
        %115 = sbr.rel (%p113) target = $region20
      $region19: #{tpu_custom_call.1} parent=5 // pred_region
        // Predicated region
        $region21: #{tpu_custom_call.1} parent=19 // pred_check
          %p116 = pneg %p56
        $region22: #{tpu_custom_call.1} parent=19 // pred_check_branch
          %118 = sbr.rel (%p116) target = $region24
        $region23: #{tpu_custom_call.1} parent=19 // pred_region
          %s119 = sand.u32 %s46, 1
          %s120 = scalar_lea.sflag [#allocation3], %s119
          %s121 = sand.u32 %s46, 1
          %s122 = smul.addr %s121, 32
          %s123 = scalar_lea.vmem [#allocation6], %s122
          %s125 = ssub.s32 512, 512
          %126 = vsyncadd %s120, %s125
          %s127 = smul.addr %s15, 4
          %s128 = smul.addr %s127, 128
          %s129 = scalar_lea.hbm %s1, %s128
          %s131 = sshll.u32 %s123, 4
          %s132 = int_to_ptr.vmem [resolvable:$true] %s131
          %134 = dma.hbm_to_vmem [thread:$0]  %s129, 512, %s132, %s120
        $region24: #{tpu_custom_call.1} parent=19 // pred_fallthru
          _
      $region20: #{tpu_custom_call.1} parent=5 // pred_fallthru
        _
      %p135 = scmp.le.s32.totalorder 1, %s15
      %p136 = scmp.lt.s32.totalorder %s15, 3
      %p137 = pnand %p135, %p136
      %p138 = pneg %p137
      // Predicated region
      $region25: #{tpu_custom_call.1} parent=5 // pred_check
        _
      $region26: #{tpu_custom_call.1} parent=5 // pred_check_branch
        %140 = sbr.rel (%p137) target = $region28
      $region27: #{tpu_custom_call.1} parent=5 // pred_region
        %s141 = ssub.s32 %s15, 1
        // Predicated region
        $region29: #{tpu_custom_call.1} parent=27 // pred_check
          %p142 = pneg %p36
        $region30: #{tpu_custom_call.1} parent=27 // pred_check_branch
          %144 = sbr.rel (%p142) target = $region32
        $region31: #{tpu_custom_call.1} parent=27 // pred_region
          %145 = dma.done [#allocation5], 16
        $region32: #{tpu_custom_call.1} parent=27 // pred_fallthru
          _
        %s146 = sand.u32 %s49, 1
        %s147 = scalar_lea.sflag [#allocation3], %s146
        %s148 = sand.u32 %s49, 1
        %s149 = smul.addr %s148, 32
        %s150 = scalar_lea.vmem [#allocation6], %s149
        // Predicated region
        $region33: #{tpu_custom_call.1} parent=27 // pred_check
          %p151 = pneg %p62
        $region34: #{tpu_custom_call.1} parent=27 // pred_check_branch
          %153 = sbr.rel (%p151) target = $region36
        $region35: #{tpu_custom_call.1} parent=27 // pred_region
          %154 = dma.done %s147, 512
        $region36: #{tpu_custom_call.1} parent=27 // pred_fallthru
          _
        %155 = sfence
        %p156 = pneg %p36
        %p157 = pneg %p33
        %s158 = sand.u32 %s49, 1
        %s159 = scalar_lea.sflag [#allocation3], %s158
        %s160 = sand.u32 %s49, 1
        %s161 = smul.addr %s160, 32
        %s162 = scalar_lea.vmem [#allocation6], %s161
        %p163 = pneg %p62
        %p164 = pneg %p59
        %p165 = pneg %p88
        %p166 = pneg %p85
        %s167 = sand.u32 %s75, 1
        %s168 = scalar_lea.sflag [#allocation4], %s167
        %s169 = sand.u32 %s75, 1
        %s170 = smul.addr %s169, 32
        %s171 = scalar_lea.vmem [#allocation7], %s170
        %v172 = vld [vmem:[%s150] sm:$0xff]
        %v173 = vld [vmem:[%s150 + $0x8] sm:$0xff]
        %v174 = vld [vmem:[%s150 + $0x10] sm:$0xff]
        %v175 = vld [vmem:[%s150 + $0x18] sm:$0xff]
        %s176 = sld [smem:[#allocation2]]
        %v177 = vstv %s176
        %v178 = vmul.f32 %v172, %v177
        %v179 = vmul.f32 %v173, %v177
        %v180 = vmul.f32 %v174, %v177
        %v181 = vmul.f32 %v175, %v177
        %s182 = sld [smem:[#allocation2 + $0x1]]
        %v183 = vstv %s182
        %v184 = vadd.f32 %v178, %v183
        %v185 = vadd.f32 %v179, %v183
        %v186 = vadd.f32 %v180, %v183
        %v187 = vadd.f32 %v181, %v183
        %188 = vst [vmem:[%s171] sm:$0xff] %v184
        %189 = vst [vmem:[%s171 + $0x8] sm:$0xff] %v185
        %190 = vst [vmem:[%s171 + $0x10] sm:$0xff] %v186
        %191 = vst [vmem:[%s171 + $0x18] sm:$0xff] %v187
        %s192 = sand.u32 %s75, 1
        %s193 = scalar_lea.sflag [#allocation4], %s192
        %s194 = sand.u32 %s75, 1
        %s195 = smul.addr %s194, 32
        %s196 = scalar_lea.vmem [#allocation7], %s195
        // Predicated region
        $region37: #{tpu_custom_call.1} parent=27 // pred_check
          %p197 = pneg %p85
        $region38: #{tpu_custom_call.1} parent=27 // pred_check_branch
          %199 = sbr.rel (%p197) target = $region40
        $region39: #{tpu_custom_call.1} parent=27 // pred_region
          %s201 = ssub.s32 512, 512
          %202 = vsyncadd %s193, %s201
          %s203 = smul.addr %s20, 4
          %s204 = smul.addr %s203, 128
          %s205 = scalar_lea.hbm %s2, %s204
          %s207 = sshll.u32 %s196, 4
          %s208 = int_to_ptr.vmem [resolvable:$true] %s207
          %210 = dma.vmem_to_hbm [thread:$0]  %s208, 512, %s205, %s193
        $region40: #{tpu_custom_call.1} parent=27 // pred_fallthru
          _
      $region28: #{tpu_custom_call.1} parent=5 // pred_fallthru
        _
      %p211 = scmp.le.s32.totalorder 2, %s15
      // Predicated region
      $region41: #{tpu_custom_call.1} parent=5 // pred_check
        %p212 = pneg %p211
      $region42: #{tpu_custom_call.1} parent=5 // pred_check_branch
        %214 = sbr.rel (%p212) target = $region44
      $region43: #{tpu_custom_call.1} parent=5 // pred_region
        %s215 = ssub.s32 %s15, 2
        // Predicated region
        $region45: #{tpu_custom_call.1} parent=43 // pred_check
          %p216 = pneg %p91
        $region46: #{tpu_custom_call.1} parent=43 // pred_check_branch
          %218 = sbr.rel (%p216) target = $region48
        $region47: #{tpu_custom_call.1} parent=43 // pred_region
          %s219 = sand.u32 %s76, 1
          %s220 = scalar_lea.sflag [#allocation4], %s219
          %s221 = sand.u32 %s76, 1
          %s222 = smul.addr %s221, 32
          %s223 = scalar_lea.vmem [#allocation7], %s222
          %224 = dma.done %s220, 512
        $region48: #{tpu_custom_call.1} parent=43 // pred_fallthru
          _
      $region44: #{tpu_custom_call.1} parent=5 // pred_fallthru
        _
    $region6: #{tpu_custom_call.1} parent=1 // loop_footer
      %s19 = sadd.s32 1, %s15
    $region7: #{tpu_custom_call.1} parent=1 // loop_footer_branch
      %14 = sbr.rel target = $region3
    $region8: #{tpu_custom_call.1} parent=1 // loop_exit
      _
    %225 = vsyncpa [#allocation3], 1
    %s226 = scalar_lea.sflag [#allocation3], 1
    %227 = vsyncpa %s226, 1
    %228 = vsyncpa [#allocation4], 1
    %s229 = scalar_lea.sflag [#allocation4], 1
    %230 = vsyncpa %s229, 1
    %231 = vsyncpa [#allocation5], 1
    %s232 = scalar_lea.sflag [#allocation5], 1
    %233 = vsyncpa %s232, 1

</llo_original>
